<compile_context>
chip_gen: v7x
topology: tpu7x:2x2x1
jax: 0.10.0
libtpu: 0.0.40
codegen_flags: <defaults>
</compile_context>

<pallas_src>
import jax
import jax.numpy as jnp
from jax import lax
from jax.experimental import pallas as pl
from jax.experimental.pallas import tpu as pltpu


def _l2_normalize_kernel(x_ref, o_ref):
    # One (tm, D) tile per grid step; reduce over the lane (feature) axis.
    x = x_ref[...].astype(jnp.float32)
    sq_sum = jnp.sum(x * x, axis=-1, keepdims=True)   # (tm, 1)
    inv_norm = lax.rsqrt(sq_sum)                       # EUP op (free slot)
    # torch semantics: x / norm with no eps -> zero rows give NaN, same here.
    o_ref[...] = (x * inv_norm).astype(o_ref.dtype)


def _sublane_pack(dtype) -> int:
    itemsize = jnp.dtype(dtype).itemsize
    return {4: 8, 2: 16, 1: 32}.get(itemsize, 8)


def _choose_tile_and_vmem(n_rows: int, d: int, dtype):
    itemsize = jnp.dtype(dtype).itemsize
    try:
        vmem_cap = pltpu.get_tpu_info().vmem_capacity_bytes
    except Exception:
        vmem_cap = 64 << 20  # conservative fallback: v7x per-TensorCore VMEM

    # Per-row VMEM cost: 4 double-buffered DMA copies (2 in + 2 out) in the
    # source dtype plus ~3 f32 temporaries inside the kernel body.
    per_row_bytes = d * (4 * itemsize + 3 * 4)
    block_budget = vmem_cap // 3
    tm = max(1, block_budget // per_row_bytes)

    pack = _sublane_pack(dtype)
    tm = max(pack, (tm // pack) * pack)            # align to sublane packing
    tm = min(tm, 2048)                             # bound per-step latency
    n_ceil = ((n_rows + pack - 1) // pack) * pack
    tm = min(tm, n_ceil)                           # don't exceed the array

    vmem_limit = int(min(vmem_cap * 3 // 4, 100 << 20))
    return int(tm), vmem_limit


def _l2_normalize_2d(x: jax.Array) -> jax.Array:
    n, d = x.shape
    tm, vmem_limit = _choose_tile_and_vmem(n, d, x.dtype)
    return pl.pallas_call(
        _l2_normalize_kernel,
        out_shape=jax.ShapeDtypeStruct((n, d), x.dtype),
        grid_spec=pltpu.PrefetchScalarGridSpec(
            num_scalar_prefetch=0,
            grid=(pl.cdiv(n, tm),),
            in_specs=[pl.BlockSpec((tm, d), lambda i: (i, 0))],
            out_specs=pl.BlockSpec((tm, d), lambda i: (i, 0)),
        ),
        compiler_params=pltpu.CompilerParams(
            dimension_semantics=("parallel",),   # shards row-tiles across TCs (v7x)
            vmem_limit_bytes=vmem_limit,
        ),
    )(x)


def normalize(x: jax.Array, dim: int = 1) -> jax.Array:
    """Pallas equivalent of Normalize(lnorm=2): x / x.norm(p=2, dim=1, keepdim=True)."""
    if x.ndim == 2 and dim in (1, -1):
        return _l2_normalize_2d(x)
    # General rank: move the normalized axis last, flatten, run the 2-D kernel.
    xm = jnp.moveaxis(x, dim, -1)
    out = _l2_normalize_2d(xm.reshape(-1, xm.shape[-1])).reshape(xm.shape)
    return jnp.moveaxis(out, -1, dim)


if __name__ == "__main__":
    key = jax.random.PRNGKey(0)
    k1, k2 = jax.random.split(key)

    # SimCLR-style feature batch: (batch, feature_dim) with a ragged batch
    # size to exercise the boundary (clipped) block.
    x2d = jax.random.normal(k1, (10, 128), dtype=jnp.float32)
    out2d = jax.block_until_ready(normalize(x2d))
    ref2d = x2d / jnp.linalg.norm(x2d, ord=2, axis=1, keepdims=True)
    assert out2d.shape == x2d.shape and out2d.dtype == x2d.dtype
    assert jnp.allclose(out2d, ref2d, atol=1e-5, rtol=1e-5)

    # Higher-rank input: norm along dim=1 (channels), like the torch module.
    x4d = jax.random.normal(k2, (2, 4, 16, 16), dtype=jnp.float32)
    out4d = jax.block_until_ready(normalize(x4d))
    ref4d = x4d / jnp.linalg.norm(x4d, ord=2, axis=1, keepdims=True)
    assert out4d.shape == x4d.shape and out4d.dtype == x4d.dtype
    assert jnp.allclose(out4d, ref4d, atol=1e-5, rtol=1e-5)

    print("KERNEL_OK")
</pallas_src>

<mosaic_0001>
module attributes {stable_mosaic.version = 11 : i64} {
  func.func @_l2_normalize_kernel(%arg0: i32, %arg1: memref<16x128xf32, #tpu.memory_space<vmem>>, %arg2: memref<16x128xf32, #tpu.memory_space<vmem>>) attributes {dimension_semantics = [#tpu.dimension_semantics<parallel>], iteration_bounds = array<i64: 1>, scalar_prefetch = 0 : i64, scratch_operands = 0 : i64, tpu.core_type = #tpu.core_type<tc>, window_params = [{transform_indices = @transform_0, window_bounds = array<i64: 16, 128>}, {transform_indices = @transform_1, window_bounds = array<i64: 16, 128>}]} {
    %c0 = arith.constant 0 : index
    %c0_0 = arith.constant 0 : index
    %0 = vector.load %arg1[%c0, %c0_0] : memref<16x128xf32, #tpu.memory_space<vmem>>, vector<16x128xf32>
    %1 = arith.mulf %0, %0 : vector<16x128xf32>
    %cst = arith.constant dense<0.000000e+00> : vector<16xf32>
    %2 = vector.multi_reduction <add>, %1, %cst [1] : vector<16x128xf32> to vector<16xf32>
    %3 = vector.shape_cast %2 : vector<16xf32> to vector<16x1xf32>
    %4 = math.rsqrt %3 : vector<16x1xf32>
    %5 = vector.broadcast %4 : vector<16x1xf32> to vector<16x128xf32>
    %6 = arith.mulf %0, %5 : vector<16x128xf32>
    %c0_1 = arith.constant 0 : index
    %c0_2 = arith.constant 0 : index
    %7 = vector.load %arg2[%c0_1, %c0_2] : memref<16x128xf32, #tpu.memory_space<vmem>>, vector<16x128xf32>
    tpu.vector_store %arg2[%c0_1, %c0_2], %6 {strides = array<i32>} : memref<16x128xf32, #tpu.memory_space<vmem>>, vector<16x128xf32>,
    return
  }
  func.func @transform_0(%arg0: i32) -> (i32, i32) {
    %c0_i32 = arith.constant 0 : i32
    %c0_i32_0 = arith.constant 0 : i32
    return %arg0, %c0_i32 : i32, i32
  }
  func.func @transform_1(%arg0: i32) -> (i32, i32) {
    %c0_i32 = arith.constant 0 : i32
    %c0_i32_0 = arith.constant 0 : i32
    return %arg0, %c0_i32 : i32, i32
  }
}

</mosaic_0001>

<llo_original>
// kernel: tpu_custom_call.1
$region0: #{tpu_custom_call.1}
  #allocation0 [shape = 'u32[]', space=smem, size = 0x4, offset = 0x4, fixed_abs, tag = 'smem constant byte address 0x4 - core index']
  #allocation1 [shape = 'u32[144,128]{1,0:T(1,128)}', space=vmem, size = 0x12000, scoped, tag = 'internal scratch']
  %s0 = inlined_call_operand.hbm [shape: f32[10,128], index: 0, kind: input, shape index: {}]
  %s1 = inlined_call_operand.hbm [shape: f32[10,128], index: 1, kind: output, shape index: {}]
  %s2 = sld [smem:[#allocation0]]
  $region18: #{tpu_custom_call.1} parent=0
    _
  %s4 = ssub.s32 1, %s2
  %s5 = scalar_select 0, %s4, %s2
  $region1: #{tpu_custom_call.1} parent=0
    #allocation2 [shape = 'u8[8192]{0}', space=vmem, size = 0x2000, scoped, tag = 'input window, operand 0, single buffered']
    #allocation3 [shape = 's32[1]{0}', space=sflag, size = 0x4, scoped, tag = 'scoped memory for tpu_custom_call.1']
    #allocation4 [shape = 's32[1]{0}', space=sflag, size = 0x4, scoped, tag = 'scoped memory for tpu_custom_call.1']
    #allocation5 [shape = 'u8[8192]{0}', space=vmem, size = 0x2000, scoped, tag = 'output window, operand 0, single buffered']
    %6 = vsyncpa [#allocation3], 0
    %7 = vsyncpa [#allocation4], 0
    // Predicated region
    $region2: #{tpu_custom_call.1} parent=1 // pred_check
      _
    $region3: #{tpu_custom_call.1} parent=1 // pred_check_branch
      %9 = sbr.rel (0) target = $region5
    $region4: #{tpu_custom_call.1} parent=1 // pred_region
      %s11 = ssub.s32 256, 256
      %12 = vsyncadd [#allocation3], %s11
      %s13 = sshll.u32 [#allocation2], 4
      %s14 = int_to_ptr.vmem [resolvable:$true] %s13
      %19 = dma.hbm_to_vmem [thread:$0]  %s0, 256, %s14, [#allocation3], 128, 128, 8
    $region5: #{tpu_custom_call.1} parent=1 // pred_fallthru
      _
    // Predicated region
    $region6: #{tpu_custom_call.1} parent=1 // pred_check
      _
    $region7: #{tpu_custom_call.1} parent=1 // pred_check_branch
      %21 = sbr.rel (0) target = $region9
    $region8: #{tpu_custom_call.1} parent=1 // pred_region
      %22 = dma.done [#allocation3], 256
    $region9: #{tpu_custom_call.1} parent=1 // pred_fallthru
      _
    %v23 = vld [vmem:[#allocation2] sm:$0xff]
    %v24 = vld [vmem:[#allocation2 + $0x8] sm:$0xff]
    %v25 = vmul.f32 %v23, %v23
    %v26 = vmul.f32 %v24, %v24
    %27 = vadd.xlane.f32.xlu0 %v25
    %v28 = vpop.xlane.xlu0 %27
    %29 = vadd.xlane.f32.xlu0 %v26
    %v30 = vpop.xlane.xlu0 %29
    %v31 = vrsqrt.pop %v28
    %v32 = vrsqrt.pop %v30
    %v33 = vmul.f32 %v23, %v31
    %v34 = vmul.f32 %v24, %v32
    %35 = vst [vmem:[#allocation5] sm:$0xff] %v33
    %36 = vst [vmem:[#allocation5 + $0x8] sm:$0xff] %v34
    // Predicated region
    $region10: #{tpu_custom_call.1} parent=1 // pred_check
      _
    $region11: #{tpu_custom_call.1} parent=1 // pred_check_branch
      %38 = sbr.rel (0) target = $region13
    $region12: #{tpu_custom_call.1} parent=1 // pred_region
      %s40 = ssub.s32 256, 256
      %41 = vsyncadd [#allocation4], %s40
      %s42 = sshll.u32 [#allocation5], 4
      %s43 = int_to_ptr.vmem [resolvable:$true] %s42
      %48 = dma.vmem_to_hbm [thread:$0]  %s43, 256, %s1, [#allocation4], 128, 128, 8
    $region13: #{tpu_custom_call.1} parent=1 // pred_fallthru
      _
    // Predicated region
    $region14: #{tpu_custom_call.1} parent=1 // pred_check
      _
    $region15: #{tpu_custom_call.1} parent=1 // pred_check_branch
      %50 = sbr.rel (0) target = $region17
    $region16: #{tpu_custom_call.1} parent=1 // pred_region
      %51 = dma.done [#allocation4], 256
    $region17: #{tpu_custom_call.1} parent=1 // pred_fallthru
      _
    %52 = vsyncpa [#allocation3], 1
    %53 = vsyncpa [#allocation4], 1

</llo_original>
